<compile_context>
chip_gen: v6e
topology: v6e:2x2x1
jax: 0.10.0
libtpu: 0.0.40
codegen_flags: <defaults>
</compile_context>

<pallas_src>
import jax
import jax.numpy as jnp
from jax.experimental import pallas as pl
from jax.experimental.pallas import tpu as pltpu


def _make_ts_cov_kernel(window: int, stride: int, T: int, F: int):
    inv_w = 1.0 / float(window)
    inv_wm1 = 1.0 / float(window - 1)

    def kernel(x_ref, o_ref):
        S = x_ref.shape[-1]

        # Banded window-sum matrix built in-kernel (VPU iota + compares run
        # underneath the MXU):  W[s, t] = 1  iff  t*stride <= s < t*stride+window.
        s_idx = jax.lax.broadcasted_iota(jnp.int32, (S, T), 0)
        t0 = jax.lax.broadcasted_iota(jnp.int32, (S, T), 1) * stride
        w = jnp.where((s_idx >= t0) & (s_idx < t0 + window), 1.0, 0.0)
        w = w.astype(jnp.float32)                                   # (S, T)

        # Per-feature rows: strided (block_b, S) loads, centered on the full
        # sequence mean (covariance is invariant to a per-(batch, feature)
        # constant shift, so this is exact and numerically much safer), plus
        # windowed sums via one MXU matmul per feature.
        xs, sums = [], []
        for f in range(F):
            v = x_ref[:, f, :].astype(jnp.float32)                  # (bB, S)
            v = v - jnp.mean(v, axis=-1, keepdims=True)
            xs.append(v)
            sums.append(jnp.dot(v, w, preferred_element_type=jnp.float32))  # (bB, T)

        # Upper-triangle pairs only, in the same (i, j) order as the PyTorch
        # loops.  cov = (sum(xi*xj) - sum(xi)*sum(xj)/n) / (n-1) on centered data.
        p = 0
        for i in range(F):
            for j in range(i + 1, F):
                cross = jnp.dot(xs[i] * xs[j], w,
                                preferred_element_type=jnp.float32)  # (bB, T)
                cov = (cross - sums[i] * sums[j] * inv_w) * inv_wm1
                o_ref[:, p, :] = cov.astype(o_ref.dtype)
                p += 1

    return kernel


def ts_cov(x: jax.Array, window: int, stride: int, *, block_b: int | None = None) -> jax.Array:
    """Pallas implementation of TsCov.forward. x: (B, F, S) -> (B, F*(F-1)//2, T)."""
    B, F, S = x.shape
    if window < 2:
        raise ValueError("TsCov requires window (min) >= 2 (unbiased covariance divides by min-1).")
    if stride < 1:
        raise ValueError("TsCov requires stride >= 1.")
    if S < window:
        raise ValueError("TsCov requires seq_length >= window.")
    T = (S - window) // stride + 1
    P = F * (F - 1) // 2
    if P == 0:
        return jnp.zeros((B, 0, T), jnp.float32)

    if block_b is None:
        # Per-batch-element working set: pipelined input tile (native dtype),
        # the F centered f32 rows + their windowed sums, and the pipelined
        # f32 output tile.  Keep it well under the 48 MiB scoped-VMEM limit
        # (which itself sits under v7x's 64 MiB physical VMEM per core).
        esize = jnp.dtype(x.dtype).itemsize
        per_b = F * S * (2 * esize + 4) + F * (S + T) * 4 + P * T * 4 * 2
        budget = 12 * 1024 * 1024
        cand = max(1, budget // max(per_b, 1))
        if cand >= B:
            block_b = B
        else:
            block_b = (cand // 8) * 8          # sublane-friendly M dimension
            if block_b == 0:
                block_b = min(8, B)
    nb = pl.cdiv(B, block_b)

    kernel = _make_ts_cov_kernel(window, stride, T, F)

    out = pl.pallas_call(
        kernel,
        out_shape=jax.ShapeDtypeStruct((B, P, T), jnp.float32),
        grid=(nb,),
        in_specs=[
            # A tile of batch elements per grid step; the last two block dims
            # (F, S) equal the full array dims, so the (8,128) rule holds.
            pl.BlockSpec((block_b, F, S), lambda b: (b, 0, 0)),
        ],
        out_specs=pl.BlockSpec((block_b, P, T), lambda b: (b, 0, 0)),
        compiler_params=pltpu.CompilerParams(
            dimension_semantics=("parallel",),        # shard batch tiles across TCs
            vmem_limit_bytes=48 * 1024 * 1024,        # < 64 MiB physical on v7x
        ),
    )(x)

    return out


def ts_cov_ref(x: jax.Array, window: int, stride: int) -> jax.Array:
    """Pure-JAX reference mirroring the PyTorch loops."""
    B, F, S = x.shape
    T = (S - window) // stride + 1
    outs = []
    for i in range(F):
        for j in range(i + 1, F):
            cols = []
            for t in range(T):
                s0 = t * stride
                seg_i = x[:, i, s0:s0 + window].astype(jnp.float32)
                seg_j = x[:, j, s0:s0 + window].astype(jnp.float32)
                mi = seg_i.mean(axis=1, keepdims=True)
                mj = seg_j.mean(axis=1, keepdims=True)
                cov = ((seg_i - mi) * (seg_j - mj)).sum(axis=1) / (window - 1)
                cols.append(cov)
            outs.append(jnp.stack(cols, axis=1))
    return jnp.stack(outs, axis=1).astype(jnp.float32)


if __name__ == "__main__":
    # TsCov(min=4, stride=2) on x of shape (batch=2, features=4, seq=16)
    MIN, STRIDE = 4, 2
    B, F, S = 2, 4, 16

    key = jax.random.PRNGKey(0)
    x = jax.random.normal(key, (B, F, S), dtype=jnp.float32)

    out = ts_cov(x, MIN, STRIDE)
    out = jax.block_until_ready(out)

    ref = ts_cov_ref(x, MIN, STRIDE)
    T = (S - MIN) // STRIDE + 1
    P = F * (F - 1) // 2
    assert out.shape == (B, P, T), out.shape
    assert out.dtype == jnp.float32
    assert jnp.allclose(out, ref, atol=1e-5, rtol=1e-5)

    print("KERNEL_OK")
</pallas_src>

<mosaic_0001>
module attributes {stable_mosaic.version = 11 : i64} {
  func.func @kernel(%arg0: i32, %arg1: memref<2x4x16xf32, #tpu.memory_space<vmem>>, %arg2: memref<2x6x7xf32, #tpu.memory_space<vmem>>) attributes {dimension_semantics = [#tpu.dimension_semantics<parallel>], iteration_bounds = array<i64: 1>, scalar_prefetch = 0 : i64, scratch_operands = 0 : i64, tpu.core_type = #tpu.core_type<tc>, window_params = [{transform_indices = @transform_0, window_bounds = array<i64: 2, 4, 16>}, {transform_indices = @transform_1, window_bounds = array<i64: 2, 6, 7>}]} {
    %0 = tpu.iota {dimensions = array<i32: 0>} : vector<16x7xi32>
    %1 = tpu.iota {dimensions = array<i32: 1>} : vector<16x7xi32>
    %c2_i32 = arith.constant 2 : i32
    %2 = vector.broadcast %c2_i32 : i32 to vector<16x7xi32>
    %3 = arith.muli %1, %2 : vector<16x7xi32>
    %4 = arith.cmpi sge, %0, %3 : vector<16x7xi32>
    %c4_i32 = arith.constant 4 : i32
    %5 = vector.broadcast %c4_i32 : i32 to vector<16x7xi32>
    %6 = arith.addi %3, %5 : vector<16x7xi32>
    %7 = arith.cmpi slt, %0, %6 : vector<16x7xi32>
    %8 = arith.andi %4, %7 : vector<16x7xi1>
    %cst = arith.constant 1.000000e+00 : f32
    %cst_0 = arith.constant 0.000000e+00 : f32
    %9 = vector.broadcast %cst : f32 to vector<16x7xf32>
    %10 = vector.broadcast %cst_0 : f32 to vector<16x7xf32>
    %11 = arith.select %8, %9, %10 : vector<16x7xi1>, vector<16x7xf32>
    %c0 = arith.constant 0 : index
    %c0_1 = arith.constant 0 : index
    %c0_2 = arith.constant 0 : index
    %12 = vector.load %arg1[%c0, %c0_1, %c0_2] : memref<2x4x16xf32, #tpu.memory_space<vmem>>, vector<2x1x16xf32>
    %13 = vector.shape_cast %12 : vector<2x1x16xf32> to vector<2x16xf32>
    %cst_3 = arith.constant dense<0.000000e+00> : vector<2xf32>
    %14 = vector.multi_reduction <add>, %13, %cst_3 [1] : vector<2x16xf32> to vector<2xf32>
    %15 = vector.shape_cast %14 : vector<2xf32> to vector<2x1xf32>
    %cst_4 = arith.constant 1.600000e+01 : f32
    %16 = vector.broadcast %cst_4 : f32 to vector<2x1xf32>
    %17 = arith.divf %15, %16 : vector<2x1xf32>
    %18 = vector.broadcast %17 : vector<2x1xf32> to vector<2x16xf32>
    %19 = arith.subf %13, %18 : vector<2x16xf32>
    %cst_5 = arith.constant dense<0.000000e+00> : vector<2x7xf32>
    %20 = tpu.matmul %19, %11, %cst_5 {dimension_numbers = #tpu.dot_dimension_numbers<[1], [0], [0], [1], [0, 0, 1, 1], [], []>} : vector<2x16xf32>, vector<16x7xf32>, vector<2x7xf32> -> vector<2x7xf32>
    %c0_6 = arith.constant 0 : index
    %c1 = arith.constant 1 : index
    %c0_7 = arith.constant 0 : index
    %21 = vector.load %arg1[%c0_6, %c1, %c0_7] : memref<2x4x16xf32, #tpu.memory_space<vmem>>, vector<2x1x16xf32>
    %22 = vector.shape_cast %21 : vector<2x1x16xf32> to vector<2x16xf32>
    %cst_8 = arith.constant dense<0.000000e+00> : vector<2xf32>
    %23 = vector.multi_reduction <add>, %22, %cst_8 [1] : vector<2x16xf32> to vector<2xf32>
    %24 = vector.shape_cast %23 : vector<2xf32> to vector<2x1xf32>
    %cst_9 = arith.constant 1.600000e+01 : f32
    %25 = vector.broadcast %cst_9 : f32 to vector<2x1xf32>
    %26 = arith.divf %24, %25 : vector<2x1xf32>
    %27 = vector.broadcast %26 : vector<2x1xf32> to vector<2x16xf32>
    %28 = arith.subf %22, %27 : vector<2x16xf32>
    %cst_10 = arith.constant dense<0.000000e+00> : vector<2x7xf32>
    %29 = tpu.matmul %28, %11, %cst_10 {dimension_numbers = #tpu.dot_dimension_numbers<[1], [0], [0], [1], [0, 0, 1, 1], [], []>} : vector<2x16xf32>, vector<16x7xf32>, vector<2x7xf32> -> vector<2x7xf32>
    %c0_11 = arith.constant 0 : index
    %c2 = arith.constant 2 : index
    %c0_12 = arith.constant 0 : index
    %30 = vector.load %arg1[%c0_11, %c2, %c0_12] : memref<2x4x16xf32, #tpu.memory_space<vmem>>, vector<2x1x16xf32>
    %31 = vector.shape_cast %30 : vector<2x1x16xf32> to vector<2x16xf32>
    %cst_13 = arith.constant dense<0.000000e+00> : vector<2xf32>
    %32 = vector.multi_reduction <add>, %31, %cst_13 [1] : vector<2x16xf32> to vector<2xf32>
    %33 = vector.shape_cast %32 : vector<2xf32> to vector<2x1xf32>
    %cst_14 = arith.constant 1.600000e+01 : f32
    %34 = vector.broadcast %cst_14 : f32 to vector<2x1xf32>
    %35 = arith.divf %33, %34 : vector<2x1xf32>
    %36 = vector.broadcast %35 : vector<2x1xf32> to vector<2x16xf32>
    %37 = arith.subf %31, %36 : vector<2x16xf32>
    %cst_15 = arith.constant dense<0.000000e+00> : vector<2x7xf32>
    %38 = tpu.matmul %37, %11, %cst_15 {dimension_numbers = #tpu.dot_dimension_numbers<[1], [0], [0], [1], [0, 0, 1, 1], [], []>} : vector<2x16xf32>, vector<16x7xf32>, vector<2x7xf32> -> vector<2x7xf32>
    %c0_16 = arith.constant 0 : index
    %c3 = arith.constant 3 : index
    %c0_17 = arith.constant 0 : index
    %39 = vector.load %arg1[%c0_16, %c3, %c0_17] : memref<2x4x16xf32, #tpu.memory_space<vmem>>, vector<2x1x16xf32>
    %40 = vector.shape_cast %39 : vector<2x1x16xf32> to vector<2x16xf32>
    %cst_18 = arith.constant dense<0.000000e+00> : vector<2xf32>
    %41 = vector.multi_reduction <add>, %40, %cst_18 [1] : vector<2x16xf32> to vector<2xf32>
    %42 = vector.shape_cast %41 : vector<2xf32> to vector<2x1xf32>
    %cst_19 = arith.constant 1.600000e+01 : f32
    %43 = vector.broadcast %cst_19 : f32 to vector<2x1xf32>
    %44 = arith.divf %42, %43 : vector<2x1xf32>
    %45 = vector.broadcast %44 : vector<2x1xf32> to vector<2x16xf32>
    %46 = arith.subf %40, %45 : vector<2x16xf32>
    %cst_20 = arith.constant dense<0.000000e+00> : vector<2x7xf32>
    %47 = tpu.matmul %46, %11, %cst_20 {dimension_numbers = #tpu.dot_dimension_numbers<[1], [0], [0], [1], [0, 0, 1, 1], [], []>} : vector<2x16xf32>, vector<16x7xf32>, vector<2x7xf32> -> vector<2x7xf32>
    %48 = arith.mulf %19, %28 : vector<2x16xf32>
    %cst_21 = arith.constant dense<0.000000e+00> : vector<2x7xf32>
    %49 = tpu.matmul %48, %11, %cst_21 {dimension_numbers = #tpu.dot_dimension_numbers<[1], [0], [0], [1], [0, 0, 1, 1], [], []>} : vector<2x16xf32>, vector<16x7xf32>, vector<2x7xf32> -> vector<2x7xf32>
    %50 = arith.mulf %20, %29 : vector<2x7xf32>
    %cst_22 = arith.constant 2.500000e-01 : f32
    %51 = vector.broadcast %cst_22 : f32 to vector<2x7xf32>
    %52 = arith.mulf %50, %51 : vector<2x7xf32>
    %53 = arith.subf %49, %52 : vector<2x7xf32>
    %cst_23 = arith.constant 0.333333343 : f32
    %54 = vector.broadcast %cst_23 : f32 to vector<2x7xf32>
    %55 = arith.mulf %53, %54 : vector<2x7xf32>
    %c0_24 = arith.constant 0 : index
    %c0_25 = arith.constant 0 : index
    %c0_26 = arith.constant 0 : index
    %56 = vector.load %arg2[%c0_24, %c0_25, %c0_26] : memref<2x6x7xf32, #tpu.memory_space<vmem>>, vector<2x1x7xf32>
    %57 = vector.shape_cast %56 : vector<2x1x7xf32> to vector<2x7xf32>
    %58 = vector.shape_cast %55 : vector<2x7xf32> to vector<2x1x7xf32>
    tpu.vector_store %arg2[%c0_24, %c0_25, %c0_26], %58 {strides = array<i32>} : memref<2x6x7xf32, #tpu.memory_space<vmem>>, vector<2x1x7xf32>,
    %59 = arith.mulf %19, %37 : vector<2x16xf32>
    %cst_27 = arith.constant dense<0.000000e+00> : vector<2x7xf32>
    %60 = tpu.matmul %59, %11, %cst_27 {dimension_numbers = #tpu.dot_dimension_numbers<[1], [0], [0], [1], [0, 0, 1, 1], [], []>} : vector<2x16xf32>, vector<16x7xf32>, vector<2x7xf32> -> vector<2x7xf32>
    %61 = arith.mulf %20, %38 : vector<2x7xf32>
    %cst_28 = arith.constant 2.500000e-01 : f32
    %62 = vector.broadcast %cst_28 : f32 to vector<2x7xf32>
    %63 = arith.mulf %61, %62 : vector<2x7xf32>
    %64 = arith.subf %60, %63 : vector<2x7xf32>
    %cst_29 = arith.constant 0.333333343 : f32
    %65 = vector.broadcast %cst_29 : f32 to vector<2x7xf32>
    %66 = arith.mulf %64, %65 : vector<2x7xf32>
    %c0_30 = arith.constant 0 : index
    %c1_31 = arith.constant 1 : index
    %c0_32 = arith.constant 0 : index
    %67 = vector.load %arg2[%c0_30, %c1_31, %c0_32] : memref<2x6x7xf32, #tpu.memory_space<vmem>>, vector<2x1x7xf32>
    %68 = vector.shape_cast %67 : vector<2x1x7xf32> to vector<2x7xf32>
    %69 = vector.shape_cast %66 : vector<2x7xf32> to vector<2x1x7xf32>
    tpu.vector_store %arg2[%c0_30, %c1_31, %c0_32], %69 {strides = array<i32>} : memref<2x6x7xf32, #tpu.memory_space<vmem>>, vector<2x1x7xf32>,
    %70 = arith.mulf %19, %46 : vector<2x16xf32>
    %cst_33 = arith.constant dense<0.000000e+00> : vector<2x7xf32>
    %71 = tpu.matmul %70, %11, %cst_33 {dimension_numbers = #tpu.dot_dimension_numbers<[1], [0], [0], [1], [0, 0, 1, 1], [], []>} : vector<2x16xf32>, vector<16x7xf32>, vector<2x7xf32> -> vector<2x7xf32>
    %72 = arith.mulf %20, %47 : vector<2x7xf32>
    %cst_34 = arith.constant 2.500000e-01 : f32
    %73 = vector.broadcast %cst_34 : f32 to vector<2x7xf32>
    %74 = arith.mulf %72, %73 : vector<2x7xf32>
    %75 = arith.subf %71, %74 : vector<2x7xf32>
    %cst_35 = arith.constant 0.333333343 : f32
    %76 = vector.broadcast %cst_35 : f32 to vector<2x7xf32>
    %77 = arith.mulf %75, %76 : vector<2x7xf32>
    %c0_36 = arith.constant 0 : index
    %c2_37 = arith.constant 2 : index
    %c0_38 = arith.constant 0 : index
    %78 = vector.load %arg2[%c0_36, %c2_37, %c0_38] : memref<2x6x7xf32, #tpu.memory_space<vmem>>, vector<2x1x7xf32>
    %79 = vector.shape_cast %78 : vector<2x1x7xf32> to vector<2x7xf32>
    %80 = vector.shape_cast %77 : vector<2x7xf32> to vector<2x1x7xf32>
    tpu.vector_store %arg2[%c0_36, %c2_37, %c0_38], %80 {strides = array<i32>} : memref<2x6x7xf32, #tpu.memory_space<vmem>>, vector<2x1x7xf32>,
    %81 = arith.mulf %28, %37 : vector<2x16xf32>
    %cst_39 = arith.constant dense<0.000000e+00> : vector<2x7xf32>
    %82 = tpu.matmul %81, %11, %cst_39 {dimension_numbers = #tpu.dot_dimension_numbers<[1], [0], [0], [1], [0, 0, 1, 1], [], []>} : vector<2x16xf32>, vector<16x7xf32>, vector<2x7xf32> -> vector<2x7xf32>
    %83 = arith.mulf %29, %38 : vector<2x7xf32>
    %cst_40 = arith.constant 2.500000e-01 : f32
    %84 = vector.broadcast %cst_40 : f32 to vector<2x7xf32>
    %85 = arith.mulf %83, %84 : vector<2x7xf32>
    %86 = arith.subf %82, %85 : vector<2x7xf32>
    %cst_41 = arith.constant 0.333333343 : f32
    %87 = vector.broadcast %cst_41 : f32 to vector<2x7xf32>
    %88 = arith.mulf %86, %87 : vector<2x7xf32>
    %c0_42 = arith.constant 0 : index
    %c3_43 = arith.constant 3 : index
    %c0_44 = arith.constant 0 : index
    %89 = vector.load %arg2[%c0_42, %c3_43, %c0_44] : memref<2x6x7xf32, #tpu.memory_space<vmem>>, vector<2x1x7xf32>
    %90 = vector.shape_cast %89 : vector<2x1x7xf32> to vector<2x7xf32>
    %91 = vector.shape_cast %88 : vector<2x7xf32> to vector<2x1x7xf32>
    tpu.vector_store %arg2[%c0_42, %c3_43, %c0_44], %91 {strides = array<i32>} : memref<2x6x7xf32, #tpu.memory_space<vmem>>, vector<2x1x7xf32>,
    %92 = arith.mulf %28, %46 : vector<2x16xf32>
    %cst_45 = arith.constant dense<0.000000e+00> : vector<2x7xf32>
    %93 = tpu.matmul %92, %11, %cst_45 {dimension_numbers = #tpu.dot_dimension_numbers<[1], [0], [0], [1], [0, 0, 1, 1], [], []>} : vector<2x16xf32>, vector<16x7xf32>, vector<2x7xf32> -> vector<2x7xf32>
    %94 = arith.mulf %29, %47 : vector<2x7xf32>
    %cst_46 = arith.constant 2.500000e-01 : f32
    %95 = vector.broadcast %cst_46 : f32 to vector<2x7xf32>
    %96 = arith.mulf %94, %95 : vector<2x7xf32>
    %97 = arith.subf %93, %96 : vector<2x7xf32>
    %cst_47 = arith.constant 0.333333343 : f32
    %98 = vector.broadcast %cst_47 : f32 to vector<2x7xf32>
    %99 = arith.mulf %97, %98 : vector<2x7xf32>
    %c0_48 = arith.constant 0 : index
    %c4 = arith.constant 4 : index
    %c0_49 = arith.constant 0 : index
    %100 = vector.load %arg2[%c0_48, %c4, %c0_49] : memref<2x6x7xf32, #tpu.memory_space<vmem>>, vector<2x1x7xf32>
    %101 = vector.shape_cast %100 : vector<2x1x7xf32> to vector<2x7xf32>
    %102 = vector.shape_cast %99 : vector<2x7xf32> to vector<2x1x7xf32>
    tpu.vector_store %arg2[%c0_48, %c4, %c0_49], %102 {strides = array<i32>} : memref<2x6x7xf32, #tpu.memory_space<vmem>>, vector<2x1x7xf32>,
    %103 = arith.mulf %37, %46 : vector<2x16xf32>
    %cst_50 = arith.constant dense<0.000000e+00> : vector<2x7xf32>
    %104 = tpu.matmul %103, %11, %cst_50 {dimension_numbers = #tpu.dot_dimension_numbers<[1], [0], [0], [1], [0, 0, 1, 1], [], []>} : vector<2x16xf32>, vector<16x7xf32>, vector<2x7xf32> -> vector<2x7xf32>
    %105 = arith.mulf %38, %47 : vector<2x7xf32>
    %cst_51 = arith.constant 2.500000e-01 : f32
    %106 = vector.broadcast %cst_51 : f32 to vector<2x7xf32>
    %107 = arith.mulf %105, %106 : vector<2x7xf32>
    %108 = arith.subf %104, %107 : vector<2x7xf32>
    %cst_52 = arith.constant 0.333333343 : f32
    %109 = vector.broadcast %cst_52 : f32 to vector<2x7xf32>
    %110 = arith.mulf %108, %109 : vector<2x7xf32>
    %c0_53 = arith.constant 0 : index
    %c5 = arith.constant 5 : index
    %c0_54 = arith.constant 0 : index
    %111 = vector.load %arg2[%c0_53, %c5, %c0_54] : memref<2x6x7xf32, #tpu.memory_space<vmem>>, vector<2x1x7xf32>
    %112 = vector.shape_cast %111 : vector<2x1x7xf32> to vector<2x7xf32>
    %113 = vector.shape_cast %110 : vector<2x7xf32> to vector<2x1x7xf32>
    tpu.vector_store %arg2[%c0_53, %c5, %c0_54], %113 {strides = array<i32>} : memref<2x6x7xf32, #tpu.memory_space<vmem>>, vector<2x1x7xf32>,
    return
  }
  func.func @transform_0(%arg0: i32) -> (i32, i32, i32) {
    %c0_i32 = arith.constant 0 : i32
    %c0_i32_0 = arith.constant 0 : i32
    %c0_i32_1 = arith.constant 0 : i32
    return %arg0, %c0_i32, %c0_i32_0 : i32, i32, i32
  }
  func.func @transform_1(%arg0: i32) -> (i32, i32, i32) {
    %c0_i32 = arith.constant 0 : i32
    %c0_i32_0 = arith.constant 0 : i32
    %c0_i32_1 = arith.constant 0 : i32
    return %arg0, %c0_i32, %c0_i32_0 : i32, i32, i32
  }
}

</mosaic_0001>

<llo_original>
// kernel: tpu_custom_call.1
$region0: #{tpu_custom_call.1}
  #allocation0 [shape = 'u32[]', space=smem, size = 0x4, offset = 0x4, fixed_abs, tag = 'smem constant byte address 0x4 - core index']
  #allocation1 [shape = 'u32[144,128]{1,0:T(1,128)}', space=vmem, size = 0x12000, scoped, tag = 'internal scratch']
  %s0 = inlined_call_operand.hbm [shape: f32[2,4,16], index: 0, kind: input, shape index: {}]
  %s1 = inlined_call_operand.vmem [shape: f32[2,6,7], index: 1, kind: output, shape index: {}]
  %s2 = sld [smem:[#allocation0]]
  $region18: #{tpu_custom_call.1} parent=0
    _
  %s4 = ssub.s32 1, %s2
  %s5 = scalar_select 0, %s4, %s2
  $region1: #{tpu_custom_call.1} parent=0
    #allocation2 [shape = 'u8[4096]{0}', space=vmem, size = 0x1000, scoped, tag = 'input window, operand 0, single buffered']
    #allocation3 [shape = 's32[1]{0}', space=sflag, size = 0x4, scoped, tag = 'scoped memory for tpu_custom_call.1']
    %6 = vsyncpa [#allocation3], 0
    // Predicated region
    $region2: #{tpu_custom_call.1} parent=1 // pred_check
      _
    $region3: #{tpu_custom_call.1} parent=1 // pred_check_branch
      %8 = sbr.rel (0) target = $region5
    $region4: #{tpu_custom_call.1} parent=1 // pred_region
      %s10 = ssub.s32 128, 128
      %11 = vsyncadd [#allocation3], %s10
      %s12 = sshll.u32 [#allocation2], 4
      %s13 = int_to_ptr.vmem [resolvable:$true] %s12
      %18 = dma.hbm_to_vmem [thread:$0]  %s0, 128, %s13, [#allocation3], 64, 64, 4
    $region5: #{tpu_custom_call.1} parent=1 // pred_fallthru
      _
    // Predicated region
    $region6: #{tpu_custom_call.1} parent=1 // pred_check
      _
    $region7: #{tpu_custom_call.1} parent=1 // pred_check_branch
      %20 = sbr.rel (0) target = $region9
    $region8: #{tpu_custom_call.1} parent=1 // pred_region
      %21 = dma.done [#allocation3], 128
    $region9: #{tpu_custom_call.1} parent=1 // pred_fallthru
      _
    %v22 = vlaneseq
    %v23 = vshrl.u32 %v22, 7
    %v24 = vadd.s32 %v23, 8
    %v25 = vlaneseq
    %v26 = vand.u32 %v25, 127
    %v27 = vmul.u32 %v26, 2
    %vm28 = vcmp.ge.s32.totalorder %v23, %v27
    %vm29 = vcmp.ge.s32.totalorder %v24, %v27
    %v30 = vadd.s32 %v27, 4
    %vm31 = vcmp.lt.s32.totalorder %v23, %v30
    %vm32 = vcmp.lt.s32.totalorder %v24, %v30
    %vm33 = vmand %vm28, %vm31
    %vm34 = vmand %vm29, %vm32
    %v35 = vsel %vm33, 1.0, 0.0
    %v36 = vsel %vm34, 1.0, 0.0
    %v37 = vld [vmem:[#allocation2] sm:$0x1]
    %v38 = vld [vmem:[#allocation2 + $0x4] sm:$0x1]
    %v41 = vrot.slane %v38, 7
    %vm42 = vcmask 1041409
    %v43 = vsel %vm42, %v41, %v37
    %vm45 = vcmask 123904
    %v46 = vsel %vm45, %v43, 0.0
    %47 = vadd.xlane.f32.xlu0 %v46
    %v48 = vpop.xlane.xlu0 %47
    %v49 = vrcp.pop 16.0
    %v50 = vmul.f32 %v48, %v49
    %v52 = vrot.slane %v50, 1
    %v55 = vsub.f32 %v37, %v50
    %v56 = vsub.f32 %v38, %v52
    %v59 = vrot.slane %v56, 7
    %v60 = vsel %vm42, %v59, %v55
    %vm61 = vcmask 130048
    %v62 = vsel %vm61, %v60, 0
    %64 = vmatprep.subr.mxu0 0.0
    %65 = vmatpush1.msra.mxu0 0.0
    %66 = vmatprep.subr.mxu0 0.0
    %67 = vmatpush1.msra.mxu0 0.0
    %68 = vmatprep.subr.mxu0 0.0
    %69 = vmatpush1.msra.mxu0 0.0
    %70 = vmatprep.subr.mxu0 0.0
    %71 = vmatpush1.msra.mxu0 0.0
    %72 = vmatprep.subr.mxu0 0.0
    %73 = vmatpush1.msra.mxu0 0.0
    %74 = vmatprep.subr.mxu0 0.0
    %75 = vmatpush1.msra.mxu0 0.0
    %76 = vmatprep.subr.mxu0 0.0
    %77 = vmatpush1.msra.mxu0 0.0
    %78 = vmatprep.subr.mxu0 0.0
    %79 = vmatpush1.msra.mxu0 0.0
    %80 = vmatprep.subr.mxu0 0.0
    %81 = vmatpush1.msra.mxu0 0.0
    %82 = vmatprep.subr.mxu0 0.0
    %83 = vmatpush1.msra.mxu0 0.0
    %84 = vmatprep.subr.mxu0 0.0
    %85 = vmatpush1.msra.mxu0 0.0
    %86 = vmatprep.subr.mxu0 0.0
    %87 = vmatpush1.msra.mxu0 0.0
    %88 = vmatprep.subr.mxu0 0.0
    %89 = vmatpush1.msra.mxu0 0.0
    %90 = vmatprep.subr.mxu0 0.0
    %91 = vmatpush1.msra.mxu0 0.0
    %92 = vmatprep.subr.mxu0 0.0
    %93 = vmatpush1.msra.mxu0 %v36
    %94 = vmatprep.subr.mxu0 0.0
    %95 = vmatpush1.msra.mxu0 %v35
    %96 = vmatprep.subr.mxu0 0.0
    %97 = vmatpush2.msra.mxu0 0.0
    %98 = vmatprep.subr.mxu0 0.0
    %99 = vmatpush2.msra.mxu0 0.0
    %100 = vmatprep.subr.mxu0 0.0
    %101 = vmatpush2.msra.mxu0 0.0
    %102 = vmatprep.subr.mxu0 0.0
    %103 = vmatpush2.msra.mxu0 0.0
    %104 = vmatprep.subr.mxu0 0.0
    %105 = vmatpush2.msra.mxu0 0.0
    %106 = vmatprep.subr.mxu0 0.0
    %107 = vmatpush2.msra.mxu0 0.0
    %108 = vmatprep.subr.mxu0 0.0
    %109 = vmatpush2.msra.mxu0 0.0
    %110 = vmatprep.subr.mxu0 0.0
    %111 = vmatpush2.msra.mxu0 0.0
    %112 = vmatprep.subr.mxu0 0.0
    %113 = vmatpush2.msra.mxu0 0.0
    %114 = vmatprep.subr.mxu0 0.0
    %115 = vmatpush2.msra.mxu0 0.0
    %116 = vmatprep.subr.mxu0 0.0
    %117 = vmatpush2.msra.mxu0 0.0
    %118 = vmatprep.subr.mxu0 0.0
    %119 = vmatpush2.msra.mxu0 0.0
    %120 = vmatprep.subr.mxu0 0.0
    %121 = vmatpush2.msra.mxu0 0.0
    %122 = vmatprep.subr.mxu0 0.0
    %123 = vmatpush2.msra.mxu0 0.0
    %124 = vmatprep.subr.mxu0 0.0
    %125 = vmatpush2.msra.mxu0 0.0
    %126 = vmatprep.subr.mxu0 0.0
    %127 = vmatpush2.msra.mxu0 0.0
    %128 = vmatprep.mubr.f32.mxu0 0.0
    %129 = vmatmul.mubr.f32.gmra.mxu0 %v62
    %v130 = vpop.f32.mrf.mxu0
    %v131 = vadd.f32 0.0, %v130
    %v132 = vpop.f32.mrf.mxu0
    %133 = vdwg.mxu0
    %v134 = vld [vmem:[#allocation2 + $0x1] sm:$0x1]
    %v135 = vld [vmem:[#allocation2 + $0x5] sm:$0x1]
    %v138 = vrot.slane %v135, 7
    %v139 = vsel %vm42, %v138, %v134
    %v141 = vsel %vm45, %v139, 0.0
    %142 = vadd.xlane.f32.xlu0 %v141
    %v143 = vpop.xlane.xlu0 %142
    %v144 = vmul.f32 %v143, %v49
    %v146 = vrot.slane %v144, 1
    %v149 = vsub.f32 %v134, %v144
    %v150 = vsub.f32 %v135, %v146
    %v153 = vrot.slane %v150, 7
    %v154 = vsel %vm42, %v153, %v149
    %v155 = vsel %vm61, %v154, 0
    %157 = vmatprep.subr.mxu0 0.0
    %158 = vmatpush1.msra.mxu0 0.0
    %159 = vmatprep.subr.mxu0 0.0
    %160 = vmatpush1.msra.mxu0 0.0
    %161 = vmatprep.subr.mxu0 0.0
    %162 = vmatpush1.msra.mxu0 0.0
    %163 = vmatprep.subr.mxu0 0.0
    %164 = vmatpush1.msra.mxu0 0.0
    %165 = vmatprep.subr.mxu0 0.0
    %166 = vmatpush1.msra.mxu0 0.0
    %167 = vmatprep.subr.mxu0 0.0
    %168 = vmatpush1.msra.mxu0 0.0
    %169 = vmatprep.subr.mxu0 0.0
    %170 = vmatpush1.msra.mxu0 0.0
    %171 = vmatprep.subr.mxu0 0.0
    %172 = vmatpush1.msra.mxu0 0.0
    %173 = vmatprep.subr.mxu0 0.0
    %174 = vmatpush1.msra.mxu0 0.0
    %175 = vmatprep.subr.mxu0 0.0
    %176 = vmatpush1.msra.mxu0 0.0
    %177 = vmatprep.subr.mxu0 0.0
    %178 = vmatpush1.msra.mxu0 0.0
    %179 = vmatprep.subr.mxu0 0.0
    %180 = vmatpush1.msra.mxu0 0.0
    %181 = vmatprep.subr.mxu0 0.0
    %182 = vmatpush1.msra.mxu0 0.0
    %183 = vmatprep.subr.mxu0 0.0
    %184 = vmatpush1.msra.mxu0 0.0
    %185 = vmatprep.subr.mxu0 0.0
    %186 = vmatpush1.msra.mxu0 %v36
    %187 = vmatprep.subr.mxu0 0.0
    %188 = vmatpush1.msra.mxu0 %v35
    %189 = vmatprep.subr.mxu0 0.0
    %190 = vmatpush2.msra.mxu0 0.0
    %191 = vmatprep.subr.mxu0 0.0
    %192 = vmatpush2.msra.mxu0 0.0
    %193 = vmatprep.subr.mxu0 0.0
    %194 = vmatpush2.msra.mxu0 0.0
    %195 = vmatprep.subr.mxu0 0.0
    %196 = vmatpush2.msra.mxu0 0.0
    %197 = vmatprep.subr.mxu0 0.0
    %198 = vmatpush2.msra.mxu0 0.0
    %199 = vmatprep.subr.mxu0 0.0
    %200 = vmatpush2.msra.mxu0 0.0
    %201 = vmatprep.subr.mxu0 0.0
    %202 = vmatpush2.msra.mxu0 0.0
    %203 = vmatprep.subr.mxu0 0.0
    %204 = vmatpush2.msra.mxu0 0.0
    %205 = vmatprep.subr.mxu0 0.0
    %206 = vmatpush2.msra.mxu0 0.0
    %207 = vmatprep.subr.mxu0 0.0
    %208 = vmatpush2.msra.mxu0 0.0
    %209 = vmatprep.subr.mxu0 0.0
    %210 = vmatpush2.msra.mxu0 0.0
    %211 = vmatprep.subr.mxu0 0.0
    %212 = vmatpush2.msra.mxu0 0.0
    %213 = vmatprep.subr.mxu0 0.0
    %214 = vmatpush2.msra.mxu0 0.0
    %215 = vmatprep.subr.mxu0 0.0
    %216 = vmatpush2.msra.mxu0 0.0
    %217 = vmatprep.subr.mxu0 0.0
    %218 = vmatpush2.msra.mxu0 0.0
    %219 = vmatprep.subr.mxu0 0.0
    %220 = vmatpush2.msra.mxu0 0.0
    %221 = vmatprep.mubr.f32.mxu0 0.0
    %222 = vmatmul.mubr.f32.gmra.mxu0 %v155
    %v223 = vpop.f32.mrf.mxu0
    %v224 = vadd.f32 0.0, %v223
    %v225 = vpop.f32.mrf.mxu0
    %226 = vdwg.mxu0
    %v227 = vld [vmem:[#allocation2 + $0x2] sm:$0x1]
    %v228 = vld [vmem:[#allocation2 + $0x6] sm:$0x1]
    %v231 = vrot.slane %v228, 7
    %v232 = vsel %vm42, %v231, %v227
    %v234 = vsel %vm45, %v232, 0.0
    %235 = vadd.xlane.f32.xlu0 %v234
    %v236 = vpop.xlane.xlu0 %235
    %v237 = vmul.f32 %v236, %v49
    %v239 = vrot.slane %v237, 1
    %v242 = vsub.f32 %v227, %v237
    %v243 = vsub.f32 %v228, %v239
    %v246 = vrot.slane %v243, 7
    %v247 = vsel %vm42, %v246, %v242
    %v248 = vsel %vm61, %v247, 0
    %250 = vmatprep.subr.mxu0 0.0
    %251 = vmatpush1.msra.mxu0 0.0
    %252 = vmatprep.subr.mxu0 0.0
    %253 = vmatpush1.msra.mxu0 0.0
    %254 = vmatprep.subr.mxu0 0.0
    %255 = vmatpush1.msra.mxu0 0.0
    %256 = vmatprep.subr.mxu0 0.0
    %257 = vmatpush1.msra.mxu0 0.0
    %258 = vmatprep.subr.mxu0 0.0
    %259 = vmatpush1.msra.mxu0 0.0
    %260 = vmatprep.subr.mxu0 0.0
    %261 = vmatpush1.msra.mxu0 0.0
    %262 = vmatprep.subr.mxu0 0.0
    %263 = vmatpush1.msra.mxu0 0.0
    %264 = vmatprep.subr.mxu0 0.0
    %265 = vmatpush1.msra.mxu0 0.0
    %266 = vmatprep.subr.mxu0 0.0
    %267 = vmatpush1.msra.mxu0 0.0
    %268 = vmatprep.subr.mxu0 0.0
    %269 = vmatpush1.msra.mxu0 0.0
    %270 = vmatprep.subr.mxu0 0.0
    %271 = vmatpush1.msra.mxu0 0.0
    %272 = vmatprep.subr.mxu0 0.0
    %273 = vmatpush1.msra.mxu0 0.0
    %274 = vmatprep.subr.mxu0 0.0
    %275 = vmatpush1.msra.mxu0 0.0
    %276 = vmatprep.subr.mxu0 0.0
    %277 = vmatpush1.msra.mxu0 0.0
    %278 = vmatprep.subr.mxu0 0.0
    %279 = vmatpush1.msra.mxu0 %v36
    %280 = vmatprep.subr.mxu0 0.0
    %281 = vmatpush1.msra.mxu0 %v35
    %282 = vmatprep.subr.mxu0 0.0
    %283 = vmatpush2.msra.mxu0 0.0
    %284 = vmatprep.subr.mxu0 0.0
    %285 = vmatpush2.msra.mxu0 0.0
    %286 = vmatprep.subr.mxu0 0.0
    %287 = vmatpush2.msra.mxu0 0.0
    %288 = vmatprep.subr.mxu0 0.0
    %289 = vmatpush2.msra.mxu0 0.0
    %290 = vmatprep.subr.mxu0 0.0
    %291 = vmatpush2.msra.mxu0 0.0
    %292 = vmatprep.subr.mxu0 0.0
    %293 = vmatpush2.msra.mxu0 0.0
    %294 = vmatprep.subr.mxu0 0.0
    %295 = vmatpush2.msra.mxu0 0.0
    %296 = vmatprep.subr.mxu0 0.0
    %297 = vmatpush2.msra.mxu0 0.0
    %298 = vmatprep.subr.mxu0 0.0
    %299 = vmatpush2.msra.mxu0 0.0
    %300 = vmatprep.subr.mxu0 0.0
    %301 = vmatpush2.msra.mxu0 0.0
    %302 = vmatprep.subr.mxu0 0.0
    %303 = vmatpush2.msra.mxu0 0.0
    %304 = vmatprep.subr.mxu0 0.0
    %305 = vmatpush2.msra.mxu0 0.0
    %306 = vmatprep.subr.mxu0 0.0
    %307 = vmatpush2.msra.mxu0 0.0
    %308 = vmatprep.subr.mxu0 0.0
    %309 = vmatpush2.msra.mxu0 0.0
    %310 = vmatprep.subr.mxu0 0.0
    %311 = vmatpush2.msra.mxu0 0.0
    %312 = vmatprep.subr.mxu0 0.0
    %313 = vmatpush2.msra.mxu0 0.0
    %314 = vmatprep.mubr.f32.mxu0 0.0
    %315 = vmatmul.mubr.f32.gmra.mxu0 %v248
    %v316 = vpop.f32.mrf.mxu0
    %v317 = vadd.f32 0.0, %v316
    %v318 = vpop.f32.mrf.mxu0
    %319 = vdwg.mxu0
    %v320 = vld [vmem:[#allocation2 + $0x3] sm:$0x1]
    %v321 = vld [vmem:[#allocation2 + $0x7] sm:$0x1]
    %v324 = vrot.slane %v321, 7
    %v325 = vsel %vm42, %v324, %v320
    %v327 = vsel %vm45, %v325, 0.0
    %328 = vadd.xlane.f32.xlu0 %v327
    %v329 = vpop.xlane.xlu0 %328
    %v330 = vmul.f32 %v329, %v49
    %v332 = vrot.slane %v330, 1
    %v335 = vsub.f32 %v320, %v330
    %v336 = vsub.f32 %v321, %v332
    %v339 = vrot.slane %v336, 7
    %v340 = vsel %vm42, %v339, %v335
    %v341 = vsel %vm61, %v340, 0
    %343 = vmatprep.subr.mxu0 0.0
    %344 = vmatpush1.msra.mxu0 0.0
    %345 = vmatprep.subr.mxu0 0.0
    %346 = vmatpush1.msra.mxu0 0.0
    %347 = vmatprep.subr.mxu0 0.0
    %348 = vmatpush1.msra.mxu0 0.0
    %349 = vmatprep.subr.mxu0 0.0
    %350 = vmatpush1.msra.mxu0 0.0
    %351 = vmatprep.subr.mxu0 0.0
    %352 = vmatpush1.msra.mxu0 0.0
    %353 = vmatprep.subr.mxu0 0.0
    %354 = vmatpush1.msra.mxu0 0.0
    %355 = vmatprep.subr.mxu0 0.0
    %356 = vmatpush1.msra.mxu0 0.0
    %357 = vmatprep.subr.mxu0 0.0
    %358 = vmatpush1.msra.mxu0 0.0
    %359 = vmatprep.subr.mxu0 0.0
    %360 = vmatpush1.msra.mxu0 0.0
    %361 = vmatprep.subr.mxu0 0.0
    %362 = vmatpush1.msra.mxu0 0.0
    %363 = vmatprep.subr.mxu0 0.0
    %364 = vmatpush1.msra.mxu0 0.0
    %365 = vmatprep.subr.mxu0 0.0
    %366 = vmatpush1.msra.mxu0 0.0
    %367 = vmatprep.subr.mxu0 0.0
    %368 = vmatpush1.msra.mxu0 0.0
    %369 = vmatprep.subr.mxu0 0.0
    %370 = vmatpush1.msra.mxu0 0.0
    %371 = vmatprep.subr.mxu0 0.0
    %372 = vmatpush1.msra.mxu0 %v36
    %373 = vmatprep.subr.mxu0 0.0
    %374 = vmatpush1.msra.mxu0 %v35
    %375 = vmatprep.subr.mxu0 0.0
    %376 = vmatpush2.msra.mxu0 0.0
    %377 = vmatprep.subr.mxu0 0.0
    %378 = vmatpush2.msra.mxu0 0.0
    %379 = vmatprep.subr.mxu0 0.0
    %380 = vmatpush2.msra.mxu0 0.0
    %381 = vmatprep.subr.mxu0 0.0
    %382 = vmatpush2.msra.mxu0 0.0
    %383 = vmatprep.subr.mxu0 0.0
    %384 = vmatpush2.msra.mxu0 0.0
    %385 = vmatprep.subr.mxu0 0.0
    %386 = vmatpush2.msra.mxu0 0.0
    %387 = vmatprep.subr.mxu0 0.0
    %388 = vmatpush2.msra.mxu0 0.0
    %389 = vmatprep.subr.mxu0 0.0
    %390 = vmatpush2.msra.mxu0 0.0
    %391 = vmatprep.subr.mxu0 0.0
    %392 = vmatpush2.msra.mxu0 0.0
    %393 = vmatprep.subr.mxu0 0.0
    %394 = vmatpush2.msra.mxu0 0.0
    %395 = vmatprep.subr.mxu0 0.0
    %396 = vmatpush2.msra.mxu0 0.0
    %397 = vmatprep.subr.mxu0 0.0
    %398 = vmatpush2.msra.mxu0 0.0
    %399 = vmatprep.subr.mxu0 0.0
    %400 = vmatpush2.msra.mxu0 0.0
    %401 = vmatprep.subr.mxu0 0.0
    %402 = vmatpush2.msra.mxu0 0.0
    %403 = vmatprep.subr.mxu0 0.0
    %404 = vmatpush2.msra.mxu0 0.0
    %405 = vmatprep.subr.mxu0 0.0
    %406 = vmatpush2.msra.mxu0 0.0
    %407 = vmatprep.mubr.f32.mxu0 0.0
    %408 = vmatmul.mubr.f32.gmra.mxu0 %v341
    %v409 = vpop.f32.mrf.mxu0
    %v410 = vadd.f32 0.0, %v409
    %v411 = vpop.f32.mrf.mxu0
    %412 = vdwg.mxu0
    %v413 = vmul.f32 %v55, %v149
    %v414 = vmul.f32 %v56, %v150
    %v417 = vrot.slane %v414, 7
    %v418 = vsel %vm42, %v417, %v413
    %v419 = vsel %vm61, %v418, 0
    %421 = vmatprep.subr.mxu0 0.0
    %422 = vmatpush1.msra.mxu0 0.0
    %423 = vmatprep.subr.mxu0 0.0
    %424 = vmatpush1.msra.mxu0 0.0
    %425 = vmatprep.subr.mxu0 0.0
    %426 = vmatpush1.msra.mxu0 0.0
    %427 = vmatprep.subr.mxu0 0.0
    %428 = vmatpush1.msra.mxu0 0.0
    %429 = vmatprep.subr.mxu0 0.0
    %430 = vmatpush1.msra.mxu0 0.0
    %431 = vmatprep.subr.mxu0 0.0
    %432 = vmatpush1.msra.mxu0 0.0
    %433 = vmatprep.subr.mxu0 0.0
    %434 = vmatpush1.msra.mxu0 0.0
    %435 = vmatprep.subr.mxu0 0.0
    %436 = vmatpush1.msra.mxu0 0.0
    %437 = vmatprep.subr.mxu0 0.0
    %438 = vmatpush1.msra.mxu0 0.0
    %439 = vmatprep.subr.mxu0 0.0
    %440 = vmatpush1.msra.mxu0 0.0
    %441 = vmatprep.subr.mxu0 0.0
    %442 = vmatpush1.msra.mxu0 0.0
    %443 = vmatprep.subr.mxu0 0.0
    %444 = vmatpush1.msra.mxu0 0.0
    %445 = vmatprep.subr.mxu0 0.0
    %446 = vmatpush1.msra.mxu0 0.0
    %447 = vmatprep.subr.mxu0 0.0
    %448 = vmatpush1.msra.mxu0 0.0
    %449 = vmatprep.subr.mxu0 0.0
    %450 = vmatpush1.msra.mxu0 %v36
    %451 = vmatprep.subr.mxu0 0.0
    %452 = vmatpush1.msra.mxu0 %v35
    %453 = vmatprep.subr.mxu0 0.0
    %454 = vmatpush2.msra.mxu0 0.0
    %455 = vmatprep.subr.mxu0 0.0
    %456 = vmatpush2.msra.mxu0 0.0
    %457 = vmatprep.subr.mxu0 0.0
    %458 = vmatpush2.msra.mxu0 0.0
    %459 = vmatprep.subr.mxu0 0.0
    %460 = vmatpush2.msra.mxu0 0.0
    %461 = vmatprep.subr.mxu0 0.0
    %462 = vmatpush2.msra.mxu0 0.0
    %463 = vmatprep.subr.mxu0 0.0
    %464 = vmatpush2.msra.mxu0 0.0
    %465 = vmatprep.subr.mxu0 0.0
    %466 = vmatpush2.msra.mxu0 0.0
    %467 = vmatprep.subr.mxu0 0.0
    %468 = vmatpush2.msra.mxu0 0.0
    %469 = vmatprep.subr.mxu0 0.0
    %470 = vmatpush2.msra.mxu0 0.0
    %471 = vmatprep.subr.mxu0 0.0
    %472 = vmatpush2.msra.mxu0 0.0
    %473 = vmatprep.subr.mxu0 0.0
    %474 = vmatpush2.msra.mxu0 0.0
    %475 = vmatprep.subr.mxu0 0.0
    %476 = vmatpush2.msra.mxu0 0.0
    %477 = vmatprep.subr.mxu0 0.0
    %478 = vmatpush2.msra.mxu0 0.0
    %479 = vmatprep.subr.mxu0 0.0
    %480 = vmatpush2.msra.mxu0 0.0
    %481 = vmatprep.subr.mxu0 0.0
    %482 = vmatpush2.msra.mxu0 0.0
    %483 = vmatprep.subr.mxu0 0.0
    %484 = vmatpush2.msra.mxu0 0.0
    %485 = vmatprep.mubr.f32.mxu0 0.0
    %486 = vmatmul.mubr.f32.gmra.mxu0 %v419
    %v487 = vpop.f32.mrf.mxu0
    %v488 = vadd.f32 0.0, %v487
    %v489 = vpop.f32.mrf.mxu0
    %490 = vdwg.mxu0
    %v491 = vmul.f32 %v131, %v224
    %v492 = vmul.f32 %v491, 0.25
    %v493 = vsub.f32 %v488, %v492
    %v494 = vmul.f32 %v493, 0.33333334
    %v497 = vunpack.c.l.s4 1966171168
    %v498 = vunpack.c.0.s8 %v497
    %v499 = vlaneseq
    %v500 = vshrl.u32 %v499, 7
    %v501 = vsub.s32 %v498, %v500
    %v502 = vrot.slane %v494, %v501
    %v503 = vcombine.high %v502, %v502
    %v505 = vunpack.c.l.s4 1966171168
    %v506 = vunpack.c.0.s8 %v505
    %v507 = vlaneseq
    %v508 = vshrl.u32 %v507, 7
    %v509 = vsub.s32 %v506, %v508
    %v510 = vrot.slane %v502, %v509
    %v512 = vunpack.c.l.s4 1966171168
    %v513 = vunpack.c.0.s8 %v512
    %v514 = vlaneseq
    %v515 = vshrl.u32 %v514, 7
    %v516 = vsub.s32 %v513, %v515
    %v517 = vrot.slane %v503, %v516
    %vm520 = vcmask 49152
    %521 = vst.msk [vmem:[%s1] sm:$0x1] %vm520, %v510
    %522 = vst.msk [vmem:[%s1 + $0x8] sm:$0x1] %vm520, %v517
    %v523 = vmul.f32 %v55, %v242
    %v524 = vmul.f32 %v56, %v243
    %v527 = vrot.slane %v524, 7
    %v528 = vsel %vm42, %v527, %v523
    %v529 = vsel %vm61, %v528, 0
    %531 = vmatprep.subr.mxu0 0.0
    %532 = vmatpush1.msra.mxu0 0.0
    %533 = vmatprep.subr.mxu0 0.0
    %534 = vmatpush1.msra.mxu0 0.0
    %535 = vmatprep.subr.mxu0 0.0
    %536 = vmatpush1.msra.mxu0 0.0
    %537 = vmatprep.subr.mxu0 0.0
    %538 = vmatpush1.msra.mxu0 0.0
    %539 = vmatprep.subr.mxu0 0.0
    %540 = vmatpush1.msra.mxu0 0.0
    %541 = vmatprep.subr.mxu0 0.0
    %542 = vmatpush1.msra.mxu0 0.0
    %543 = vmatprep.subr.mxu0 0.0
    %544 = vmatpush1.msra.mxu0 0.0
    %545 = vmatprep.subr.mxu0 0.0
    %546 = vmatpush1.msra.mxu0 0.0
    %547 = vmatprep.subr.mxu0 0.0
    %548 = vmatpush1.msra.mxu0 0.0
    %549 = vmatprep.subr.mxu0 0.0
    %550 = vmatpush1.msra.mxu0 0.0
    %551 = vmatprep.subr.mxu0 0.0
    %552 = vmatpush1.msra.mxu0 0.0
    %553 = vmatprep.subr.mxu0 0.0
    %554 = vmatpush1.msra.mxu0 0.0
    %555 = vmatprep.subr.mxu0 0.0
    %556 = vmatpush1.msra.mxu0 0.0
    %557 = vmatprep.subr.mxu0 0.0
    %558 = vmatpush1.msra.mxu0 0.0
    %559 = vmatprep.subr.mxu0 0.0
    %560 = vmatpush1.msra.mxu0 %v36
    %561 = vmatprep.subr.mxu0 0.0
    %562 = vmatpush1.msra.mxu0 %v35
    %563 = vmatprep.subr.mxu0 0.0
    %564 = vmatpush2.msra.mxu0 0.0
    %565 = vmatprep.subr.mxu0 0.0
    %566 = vmatpush2.msra.mxu0 0.0
    %567 = vmatprep.subr.mxu0 0.0
    %568 = vmatpush2.msra.mxu0 0.0
    %569 = vmatprep.subr.mxu0 0.0
    %570 = vmatpush2.msra.mxu0 0.0
    %571 = vmatprep.subr.mxu0 0.0
    %572 = vmatpush2.msra.mxu0 0.0
    %573 = vmatprep.subr.mxu0 0.0
    %574 = vmatpush2.msra.mxu0 0.0
    %575 = vmatprep.subr.mxu0 0.0
    %576 = vmatpush2.msra.mxu0 0.0
    %577 = vmatprep.subr.mxu0 0.0
    %578 = vmatpush2.msra.mxu0 0.0
    %579 = vmatprep.subr.mxu0 0.0
    %580 = vmatpush2.msra.mxu0 0.0
    %581 = vmatprep.subr.mxu0 0.0
    %582 = vmatpush2.msra.mxu0 0.0
    %583 = vmatprep.subr.mxu0 0.0
    %584 = vmatpush2.msra.mxu0 0.0
    %585 = vmatprep.subr.mxu0 0.0
    %586 = vmatpush2.msra.mxu0 0.0
    %587 = vmatprep.subr.mxu0 0.0
    %588 = vmatpush2.msra.mxu0 0.0
    %589 = vmatprep.subr.mxu0 0.0
    %590 = vmatpush2.msra.mxu0 0.0
    %591 = vmatprep.subr.mxu0 0.0
    %592 = vmatpush2.msra.mxu0 0.0
    %593 = vmatprep.subr.mxu0 0.0
    %594 = vmatpush2.msra.mxu0 0.0
    %595 = vmatprep.mubr.f32.mxu0 0.0
    %596 = vmatmul.mubr.f32.gmra.mxu0 %v529
    %v597 = vpop.f32.mrf.mxu0
    %v598 = vadd.f32 0.0, %v597
    %v599 = vpop.f32.mrf.mxu0
    %600 = vdwg.mxu0
    %v601 = vmul.f32 %v131, %v317
    %v602 = vmul.f32 %v601, 0.25
    %v603 = vsub.f32 %v598, %v602
    %v604 = vmul.f32 %v603, 0.33333334
    %v607 = vunpack.c.l.s4 1966171168
    %v608 = vunpack.c.0.s8 %v607
    %v609 = vlaneseq
    %v610 = vshrl.u32 %v609, 7
    %v611 = vsub.s32 %v608, %v610
    %v612 = vrot.slane %v604, %v611
    %v613 = vcombine.high %v612, %v612
    %v615 = vunpack.c.l.s4 1966171168
    %v616 = vunpack.c.0.s8 %v615
    %v617 = vlaneseq
    %v618 = vshrl.u32 %v617, 7
    %v619 = vsub.s32 %v616, %v618
    %v620 = vrot.slane %v612, %v619
    %v622 = vunpack.c.l.s4 1966171168
    %v623 = vunpack.c.0.s8 %v622
    %v624 = vlaneseq
    %v625 = vshrl.u32 %v624, 7
    %v626 = vsub.s32 %v623, %v625
    %v627 = vrot.slane %v613, %v626
    %630 = vst.msk [vmem:[%s1 + $0x1] sm:$0x1] %vm520, %v620
    %631 = vst.msk [vmem:[%s1 + $0x9] sm:$0x1] %vm520, %v627
    %v632 = vmul.f32 %v55, %v335
    %v633 = vmul.f32 %v56, %v336
    %v636 = vrot.slane %v633, 7
    %v637 = vsel %vm42, %v636, %v632
    %v638 = vsel %vm61, %v637, 0
    %640 = vmatprep.subr.mxu0 0.0
    %641 = vmatpush1.msra.mxu0 0.0
    %642 = vmatprep.subr.mxu0 0.0
    %643 = vmatpush1.msra.mxu0 0.0
    %644 = vmatprep.subr.mxu0 0.0
    %645 = vmatpush1.msra.mxu0 0.0
    %646 = vmatprep.subr.mxu0 0.0
    %647 = vmatpush1.msra.mxu0 0.0
    %648 = vmatprep.subr.mxu0 0.0
    %649 = vmatpush1.msra.mxu0 0.0
    %650 = vmatprep.subr.mxu0 0.0
    %651 = vmatpush1.msra.mxu0 0.0
    %652 = vmatprep.subr.mxu0 0.0
    %653 = vmatpush1.msra.mxu0 0.0
    %654 = vmatprep.subr.mxu0 0.0
    %655 = vmatpush1.msra.mxu0 0.0
    %656 = vmatprep.subr.mxu0 0.0
    %657 = vmatpush1.msra.mxu0 0.0
    %658 = vmatprep.subr.mxu0 0.0
    %659 = vmatpush1.msra.mxu0 0.0
    %660 = vmatprep.subr.mxu0 0.0
    %661 = vmatpush1.msra.mxu0 0.0
    %662 = vmatprep.subr.mxu0 0.0
    %663 = vmatpush1.msra.mxu0 0.0
    %664 = vmatprep.subr.mxu0 0.0
    %665 = vmatpush1.msra.mxu0 0.0
    %666 = vmatprep.subr.mxu0 0.0
    %667 = vmatpush1.msra.mxu0 0.0
    %668 = vmatprep.subr.mxu0 0.0
    %669 = vmatpush1.msra.mxu0 %v36
    %670 = vmatprep.subr.mxu0 0.0
    %671 = vmatpush1.msra.mxu0 %v35
    %672 = vmatprep.subr.mxu0 0.0
    %673 = vmatpush2.msra.mxu0 0.0
    %674 = vmatprep.subr.mxu0 0.0
    %675 = vmatpush2.msra.mxu0 0.0
    %676 = vmatprep.subr.mxu0 0.0
    %677 = vmatpush2.msra.mxu0 0.0
    %678 = vmatprep.subr.mxu0 0.0
    %679 = vmatpush2.msra.mxu0 0.0
    %680 = vmatprep.subr.mxu0 0.0
    %681 = vmatpush2.msra.mxu0 0.0
    %682 = vmatprep.subr.mxu0 0.0
    %683 = vmatpush2.msra.mxu0 0.0
    %684 = vmatprep.subr.mxu0 0.0
    %685 = vmatpush2.msra.mxu0 0.0
    %686 = vmatprep.subr.mxu0 0.0
    %687 = vmatpush2.msra.mxu0 0.0
    %688 = vmatprep.subr.mxu0 0.0
    %689 = vmatpush2.msra.mxu0 0.0
    %690 = vmatprep.subr.mxu0 0.0
    %691 = vmatpush2.msra.mxu0 0.0
    %692 = vmatprep.subr.mxu0 0.0
    %693 = vmatpush2.msra.mxu0 0.0
    %694 = vmatprep.subr.mxu0 0.0
    %695 = vmatpush2.msra.mxu0 0.0
    %696 = vmatprep.subr.mxu0 0.0
    %697 = vmatpush2.msra.mxu0 0.0
    %698 = vmatprep.subr.mxu0 0.0
    %699 = vmatpush2.msra.mxu0 0.0
    %700 = vmatprep.subr.mxu0 0.0
    %701 = vmatpush2.msra.mxu0 0.0
    %702 = vmatprep.subr.mxu0 0.0
    %703 = vmatpush2.msra.mxu0 0.0
    %704 = vmatprep.mubr.f32.mxu0 0.0
    %705 = vmatmul.mubr.f32.gmra.mxu0 %v638
    %v706 = vpop.f32.mrf.mxu0
    %v707 = vadd.f32 0.0, %v706
    %v708 = vpop.f32.mrf.mxu0
    %709 = vdwg.mxu0
    %v710 = vmul.f32 %v131, %v410
    %v711 = vmul.f32 %v710, 0.25
    %v712 = vsub.f32 %v707, %v711
    %v713 = vmul.f32 %v712, 0.33333334
    %v716 = vunpack.c.l.s4 1966171168
    %v717 = vunpack.c.0.s8 %v716
    %v718 = vlaneseq
    %v719 = vshrl.u32 %v718, 7
    %v720 = vsub.s32 %v717, %v719
    %v721 = vrot.slane %v713, %v720
    %v722 = vcombine.high %v721, %v721
    %v724 = vunpack.c.l.s4 1966171168
    %v725 = vunpack.c.0.s8 %v724
    %v726 = vlaneseq
    %v727 = vshrl.u32 %v726, 7
    %v728 = vsub.s32 %v725, %v727
    %v729 = vrot.slane %v721, %v728
    %v731 = vunpack.c.l.s4 1966171168
    %v732 = vunpack.c.0.s8 %v731
    %v733 = vlaneseq
    %v734 = vshrl.u32 %v733, 7
    %v735 = vsub.s32 %v732, %v734
    %v736 = vrot.slane %v722, %v735
    %739 = vst.msk [vmem:[%s1 + $0x2] sm:$0x1] %vm520, %v729
    %740 = vst.msk [vmem:[%s1 + $0xa] sm:$0x1] %vm520, %v736
    %v741 = vmul.f32 %v149, %v242
    %v742 = vmul.f32 %v150, %v243
    %v745 = vrot.slane %v742, 7
    %v746 = vsel %vm42, %v745, %v741
    %v747 = vsel %vm61, %v746, 0
    %749 = vmatprep.subr.mxu0 0.0
    %750 = vmatpush1.msra.mxu0 0.0
    %751 = vmatprep.subr.mxu0 0.0
    %752 = vmatpush1.msra.mxu0 0.0
    %753 = vmatprep.subr.mxu0 0.0
    %754 = vmatpush1.msra.mxu0 0.0
    %755 = vmatprep.subr.mxu0 0.0
    %756 = vmatpush1.msra.mxu0 0.0
    %757 = vmatprep.subr.mxu0 0.0
    %758 = vmatpush1.msra.mxu0 0.0
    %759 = vmatprep.subr.mxu0 0.0
    %760 = vmatpush1.msra.mxu0 0.0
    %761 = vmatprep.subr.mxu0 0.0
    %762 = vmatpush1.msra.mxu0 0.0
    %763 = vmatprep.subr.mxu0 0.0
    %764 = vmatpush1.msra.mxu0 0.0
    %765 = vmatprep.subr.mxu0 0.0
    %766 = vmatpush1.msra.mxu0 0.0
    %767 = vmatprep.subr.mxu0 0.0
    %768 = vmatpush1.msra.mxu0 0.0
    %769 = vmatprep.subr.mxu0 0.0
    %770 = vmatpush1.msra.mxu0 0.0
    %771 = vmatprep.subr.mxu0 0.0
    %772 = vmatpush1.msra.mxu0 0.0
    %773 = vmatprep.subr.mxu0 0.0
    %774 = vmatpush1.msra.mxu0 0.0
    %775 = vmatprep.subr.mxu0 0.0
    %776 = vmatpush1.msra.mxu0 0.0
    %777 = vmatprep.subr.mxu0 0.0
    %778 = vmatpush1.msra.mxu0 %v36
    %779 = vmatprep.subr.mxu0 0.0
    %780 = vmatpush1.msra.mxu0 %v35
    %781 = vmatprep.subr.mxu0 0.0
    %782 = vmatpush2.msra.mxu0 0.0
    %783 = vmatprep.subr.mxu0 0.0
    %784 = vmatpush2.msra.mxu0 0.0
    %785 = vmatprep.subr.mxu0 0.0
    %786 = vmatpush2.msra.mxu0 0.0
    %787 = vmatprep.subr.mxu0 0.0
    %788 = vmatpush2.msra.mxu0 0.0
    %789 = vmatprep.subr.mxu0 0.0
    %790 = vmatpush2.msra.mxu0 0.0
    %791 = vmatprep.subr.mxu0 0.0
    %792 = vmatpush2.msra.mxu0 0.0
    %793 = vmatprep.subr.mxu0 0.0
    %794 = vmatpush2.msra.mxu0 0.0
    %795 = vmatprep.subr.mxu0 0.0
    %796 = vmatpush2.msra.mxu0 0.0
    %797 = vmatprep.subr.mxu0 0.0
    %798 = vmatpush2.msra.mxu0 0.0
    %799 = vmatprep.subr.mxu0 0.0
    %800 = vmatpush2.msra.mxu0 0.0
    %801 = vmatprep.subr.mxu0 0.0
    %802 = vmatpush2.msra.mxu0 0.0
    %803 = vmatprep.subr.mxu0 0.0
    %804 = vmatpush2.msra.mxu0 0.0
    %805 = vmatprep.subr.mxu0 0.0
    %806 = vmatpush2.msra.mxu0 0.0
    %807 = vmatprep.subr.mxu0 0.0
    %808 = vmatpush2.msra.mxu0 0.0
    %809 = vmatprep.subr.mxu0 0.0
    %810 = vmatpush2.msra.mxu0 0.0
    %811 = vmatprep.subr.mxu0 0.0
    %812 = vmatpush2.msra.mxu0 0.0
    %813 = vmatprep.mubr.f32.mxu0 0.0
    %814 = vmatmul.mubr.f32.gmra.mxu0 %v747
    %v815 = vpop.f32.mrf.mxu0
    %v816 = vadd.f32 0.0, %v815
    %v817 = vpop.f32.mrf.mxu0
    %818 = vdwg.mxu0
    %v819 = vmul.f32 %v224, %v317
    %v820 = vmul.f32 %v819, 0.25
    %v821 = vsub.f32 %v816, %v820
    %v822 = vmul.f32 %v821, 0.33333334
    %v825 = vunpack.c.l.s4 1966171168
    %v826 = vunpack.c.0.s8 %v825
    %v827 = vlaneseq
    %v828 = vshrl.u32 %v827, 7
    %v829 = vsub.s32 %v826, %v828
    %v830 = vrot.slane %v822, %v829
    %v831 = vcombine.high %v830, %v830
    %v833 = vunpack.c.l.s4 1966171168
    %v834 = vunpack.c.0.s8 %v833
    %v835 = vlaneseq
    %v836 = vshrl.u32 %v835, 7
    %v837 = vsub.s32 %v834, %v836
    %v838 = vrot.slane %v830, %v837
    %v840 = vunpack.c.l.s4 1966171168
    %v841 = vunpack.c.0.s8 %v840
    %v842 = vlaneseq
    %v843 = vshrl.u32 %v842, 7
    %v844 = vsub.s32 %v841, %v843
    %v845 = vrot.slane %v831, %v844
    %848 = vst.msk [vmem:[%s1 + $0x3] sm:$0x1] %vm520, %v838
    %849 = vst.msk [vmem:[%s1 + $0xb] sm:$0x1] %vm520, %v845
    %v850 = vmul.f32 %v149, %v335
    %v851 = vmul.f32 %v150, %v336
    %v854 = vrot.slane %v851, 7
    %v855 = vsel %vm42, %v854, %v850
    %v856 = vsel %vm61, %v855, 0
    %858 = vmatprep.subr.mxu0 0.0
    %859 = vmatpush1.msra.mxu0 0.0
    %860 = vmatprep.subr.mxu0 0.0
    %861 = vmatpush1.msra.mxu0 0.0
    %862 = vmatprep.subr.mxu0 0.0
    %863 = vmatpush1.msra.mxu0 0.0
    %864 = vmatprep.subr.mxu0 0.0
    %865 = vmatpush1.msra.mxu0 0.0
    %866 = vmatprep.subr.mxu0 0.0
    %867 = vmatpush1.msra.mxu0 0.0
    %868 = vmatprep.subr.mxu0 0.0
    %869 = vmatpush1.msra.mxu0 0.0
    %870 = vmatprep.subr.mxu0 0.0
    %871 = vmatpush1.msra.mxu0 0.0
    %872 = vmatprep.subr.mxu0 0.0
    %873 = vmatpush1.msra.mxu0 0.0
    %874 = vmatprep.subr.mxu0 0.0
    %875 = vmatpush1.msra.mxu0 0.0
    %876 = vmatprep.subr.mxu0 0.0
    %877 = vmatpush1.msra.mxu0 0.0
    %878 = vmatprep.subr.mxu0 0.0
    %879 = vmatpush1.msra.mxu0 0.0
    %880 = vmatprep.subr.mxu0 0.0
    %881 = vmatpush1.msra.mxu0 0.0
    %882 = vmatprep.subr.mxu0 0.0
    %883 = vmatpush1.msra.mxu0 0.0
    %884 = vmatprep.subr.mxu0 0.0
    %885 = vmatpush1.msra.mxu0 0.0
    %886 = vmatprep.subr.mxu0 0.0
    %887 = vmatpush1.msra.mxu0 %v36
    %888 = vmatprep.subr.mxu0 0.0
    %889 = vmatpush1.msra.mxu0 %v35
    %890 = vmatprep.subr.mxu0 0.0
    %891 = vmatpush2.msra.mxu0 0.0
    %892 = vmatprep.subr.mxu0 0.0
    %893 = vmatpush2.msra.mxu0 0.0
    %894 = vmatprep.subr.mxu0 0.0
    %895 = vmatpush2.msra.mxu0 0.0
    %896 = vmatprep.subr.mxu0 0.0
    %897 = vmatpush2.msra.mxu0 0.0
    %898 = vmatprep.subr.mxu0 0.0
    %899 = vmatpush2.msra.mxu0 0.0
    %900 = vmatprep.subr.mxu0 0.0
    %901 = vmatpush2.msra.mxu0 0.0
    %902 = vmatprep.subr.mxu0 0.0
    %903 = vmatpush2.msra.mxu0 0.0
    %904 = vmatprep.subr.mxu0 0.0
    %905 = vmatpush2.msra.mxu0 0.0
    %906 = vmatprep.subr.mxu0 0.0
    %907 = vmatpush2.msra.mxu0 0.0
    %908 = vmatprep.subr.mxu0 0.0
    %909 = vmatpush2.msra.mxu0 0.0
    %910 = vmatprep.subr.mxu0 0.0
    %911 = vmatpush2.msra.mxu0 0.0
    %912 = vmatprep.subr.mxu0 0.0
    %913 = vmatpush2.msra.mxu0 0.0
    %914 = vmatprep.subr.mxu0 0.0
    %915 = vmatpush2.msra.mxu0 0.0
    %916 = vmatprep.subr.mxu0 0.0
    %917 = vmatpush2.msra.mxu0 0.0
    %918 = vmatprep.subr.mxu0 0.0
    %919 = vmatpush2.msra.mxu0 0.0
    %920 = vmatprep.subr.mxu0 0.0
    %921 = vmatpush2.msra.mxu0 0.0
    %922 = vmatprep.mubr.f32.mxu0 0.0
    %923 = vmatmul.mubr.f32.gmra.mxu0 %v856
    %v924 = vpop.f32.mrf.mxu0
    %v925 = vadd.f32 0.0, %v924
    %v926 = vpop.f32.mrf.mxu0
    %927 = vdwg.mxu0
    %v928 = vmul.f32 %v224, %v410
    %v929 = vmul.f32 %v928, 0.25
    %v930 = vsub.f32 %v925, %v929
    %v931 = vmul.f32 %v930, 0.33333334
    %v934 = vunpack.c.l.s4 1966171168
    %v935 = vunpack.c.0.s8 %v934
    %v936 = vlaneseq
    %v937 = vshrl.u32 %v936, 7
    %v938 = vsub.s32 %v935, %v937
    %v939 = vrot.slane %v931, %v938
    %v940 = vcombine.high %v939, %v939
    %v942 = vunpack.c.l.s4 1966171168
    %v943 = vunpack.c.0.s8 %v942
    %v944 = vlaneseq
    %v945 = vshrl.u32 %v944, 7
    %v946 = vsub.s32 %v943, %v945
    %v947 = vrot.slane %v939, %v946
    %v949 = vunpack.c.l.s4 1966171168
    %v950 = vunpack.c.0.s8 %v949
    %v951 = vlaneseq
    %v952 = vshrl.u32 %v951, 7
    %v953 = vsub.s32 %v950, %v952
    %v954 = vrot.slane %v940, %v953
    %957 = vst.msk [vmem:[%s1 + $0x4] sm:$0x1] %vm520, %v947
    %958 = vst.msk [vmem:[%s1 + $0xc] sm:$0x1] %vm520, %v954
    %v959 = vmul.f32 %v242, %v335
    %v960 = vmul.f32 %v243, %v336
    %v963 = vrot.slane %v960, 7
    %v964 = vsel %vm42, %v963, %v959
    %v965 = vsel %vm61, %v964, 0
    %967 = vmatprep.subr.mxu0 0.0
    %968 = vmatpush1.msra.mxu0 0.0
    %969 = vmatprep.subr.mxu0 0.0
    %970 = vmatpush1.msra.mxu0 0.0
    %971 = vmatprep.subr.mxu0 0.0
    %972 = vmatpush1.msra.mxu0 0.0
    %973 = vmatprep.subr.mxu0 0.0
    %974 = vmatpush1.msra.mxu0 0.0
    %975 = vmatprep.subr.mxu0 0.0
    %976 = vmatpush1.msra.mxu0 0.0
    %977 = vmatprep.subr.mxu0 0.0
    %978 = vmatpush1.msra.mxu0 0.0
    %979 = vmatprep.subr.mxu0 0.0
    %980 = vmatpush1.msra.mxu0 0.0
    %981 = vmatprep.subr.mxu0 0.0
    %982 = vmatpush1.msra.mxu0 0.0
    %983 = vmatprep.subr.mxu0 0.0
    %984 = vmatpush1.msra.mxu0 0.0
    %985 = vmatprep.subr.mxu0 0.0
    %986 = vmatpush1.msra.mxu0 0.0
    %987 = vmatprep.subr.mxu0 0.0
    %988 = vmatpush1.msra.mxu0 0.0
    %989 = vmatprep.subr.mxu0 0.0
    %990 = vmatpush1.msra.mxu0 0.0
    %991 = vmatprep.subr.mxu0 0.0
    %992 = vmatpush1.msra.mxu0 0.0
    %993 = vmatprep.subr.mxu0 0.0
    %994 = vmatpush1.msra.mxu0 0.0
    %995 = vmatprep.subr.mxu0 0.0
    %996 = vmatpush1.msra.mxu0 %v36
    %997 = vmatprep.subr.mxu0 0.0
    %998 = vmatpush1.msra.mxu0 %v35
    %999 = vmatprep.subr.mxu0 0.0
    %1000 = vmatpush2.msra.mxu0 0.0
    %1001 = vmatprep.subr.mxu0 0.0
    %1002 = vmatpush2.msra.mxu0 0.0
    %1003 = vmatprep.subr.mxu0 0.0
    %1004 = vmatpush2.msra.mxu0 0.0
    %1005 = vmatprep.subr.mxu0 0.0
    %1006 = vmatpush2.msra.mxu0 0.0
    %1007 = vmatprep.subr.mxu0 0.0
    %1008 = vmatpush2.msra.mxu0 0.0
    %1009 = vmatprep.subr.mxu0 0.0
    %1010 = vmatpush2.msra.mxu0 0.0
    %1011 = vmatprep.subr.mxu0 0.0
    %1012 = vmatpush2.msra.mxu0 0.0
    %1013 = vmatprep.subr.mxu0 0.0
    %1014 = vmatpush2.msra.mxu0 0.0
    %1015 = vmatprep.subr.mxu0 0.0
    %1016 = vmatpush2.msra.mxu0 0.0
    %1017 = vmatprep.subr.mxu0 0.0
    %1018 = vmatpush2.msra.mxu0 0.0
    %1019 = vmatprep.subr.mxu0 0.0
    %1020 = vmatpush2.msra.mxu0 0.0
    %1021 = vmatprep.subr.mxu0 0.0
    %1022 = vmatpush2.msra.mxu0 0.0
    %1023 = vmatprep.subr.mxu0 0.0
    %1024 = vmatpush2.msra.mxu0 0.0
    %1025 = vmatprep.subr.mxu0 0.0
    %1026 = vmatpush2.msra.mxu0 0.0
    %1027 = vmatprep.subr.mxu0 0.0
    %1028 = vmatpush2.msra.mxu0 0.0
    %1029 = vmatprep.subr.mxu0 0.0
    %1030 = vmatpush2.msra.mxu0 0.0
    %1031 = vmatprep.mubr.f32.mxu0 0.0
    %1032 = vmatmul.mubr.f32.gmra.mxu0 %v965
    %v1033 = vpop.f32.mrf.mxu0
    %v1034 = vadd.f32 0.0, %v1033
    %v1035 = vpop.f32.mrf.mxu0
    %1036 = vdwg.mxu0
    %v1037 = vmul.f32 %v317, %v410
    %v1038 = vmul.f32 %v1037, 0.25
    %v1039 = vsub.f32 %v1034, %v1038
    %v1040 = vmul.f32 %v1039, 0.33333334
    %v1043 = vunpack.c.l.s4 1966171168
    %v1044 = vunpack.c.0.s8 %v1043
    %v1045 = vlaneseq
    %v1046 = vshrl.u32 %v1045, 7
    %v1047 = vsub.s32 %v1044, %v1046
    %v1048 = vrot.slane %v1040, %v1047
    %v1049 = vcombine.high %v1048, %v1048
    %v1051 = vunpack.c.l.s4 1966171168
    %v1052 = vunpack.c.0.s8 %v1051
    %v1053 = vlaneseq
    %v1054 = vshrl.u32 %v1053, 7
    %v1055 = vsub.s32 %v1052, %v1054
    %v1056 = vrot.slane %v1048, %v1055
    %v1058 = vunpack.c.l.s4 1966171168
    %v1059 = vunpack.c.0.s8 %v1058
    %v1060 = vlaneseq
    %v1061 = vshrl.u32 %v1060, 7
    %v1062 = vsub.s32 %v1059, %v1061
    %v1063 = vrot.slane %v1049, %v1062
    %1066 = vst.msk [vmem:[%s1 + $0x5] sm:$0x1] %vm520, %v1056
    %1067 = vst.msk [vmem:[%s1 + $0xd] sm:$0x1] %vm520, %v1063
    // Predicated region
    $region10: #{tpu_custom_call.1} parent=1 // pred_check
      _
    $region11: #{tpu_custom_call.1} parent=1 // pred_check_branch
      %1069 = sbr.rel (0) target = $region13
    $region12: #{tpu_custom_call.1} parent=1 // pred_region
      _
    $region13: #{tpu_custom_call.1} parent=1 // pred_fallthru
      _
    // Predicated region
    $region14: #{tpu_custom_call.1} parent=1 // pred_check
      _
    $region15: #{tpu_custom_call.1} parent=1 // pred_check_branch
      %1071 = sbr.rel (0) target = $region17
    $region16: #{tpu_custom_call.1} parent=1 // pred_region
      _
    $region17: #{tpu_custom_call.1} parent=1 // pred_fallthru
      _
    %1072 = vsyncpa [#allocation3], 1

</llo_original>
